<compile_context>
chip_gen: v7x
topology: tpu7x:2x2x1
jax: 0.10.0
libtpu: 0.0.40
codegen_flags: <defaults>
</compile_context>

<pallas_src>
import functools
import numpy as np
import jax
import jax.numpy as jnp
from jax import lax
from jax.experimental import pallas as pl
from jax.experimental.pallas import tpu as pltpu


def attn_model_kernel(x_ref, mask_ref, src_ref, wqkv_ref, wfc_ref, wm_ref,
                      vec_ref, out_ref, attn_ref,
                      *, B, N, D, M, H, dk, Rq):
    Hdk = H * dk
    x = x_ref[...]                                     # [Rq + B*N, M]

    # ---- fused Q/K/V projection: one MXU matmul (scale folded into wq) ----
    proj = jnp.dot(x, wqkv_ref[...],
                   preferred_element_type=jnp.float32)  # [Rq + B*N, 3*Hdk]

    mask = mask_ref[...]                                # [B, N] (1.0 == null)
    is_null = mask > 0.5

    attn_rows = []
    ctx_parts = []
    for h in range(H):                                  # static, tiny (H == 2)
        qh = proj[0:B, h * dk:(h + 1) * dk]             # [B, dk]
        kh = proj[Rq:, Hdk + h * dk:Hdk + (h + 1) * dk].reshape(B, N, dk)
        vh = proj[Rq:, 2 * Hdk + h * dk:2 * Hdk + (h + 1) * dk].reshape(B, N, dk)

        # scores: VPU broadcast-multiply + lane reduce (dk tiny -> no MXU)
        s = jnp.sum(qh[:, None, :] * kh, axis=-1)       # [B, N]
        s = jnp.where(is_null, -1e10, s)                # exact masked_fill
        s = s - jnp.max(s, axis=-1, keepdims=True)
        e = jnp.exp(s)
        p = e / jnp.sum(e, axis=-1, keepdims=True)      # exact reciprocal
        attn_rows.append(p)

        # context: [B, N] x [B, N, dk] -> [B, dk] via sublane reduce
        ctx_parts.append(jnp.sum(p[:, :, None] * vh, axis=1))

    # attention probs, group index g = h*B + b (torch layout), single store
    attn_ref[...] = jnp.concatenate(attn_rows, axis=0)  # [H*B, N]

    # ---- output fc: one matmul against the unsplit wfc ----
    ctx = jnp.concatenate(ctx_parts, axis=-1)           # [B, H*dk]
    fc_out = (jnp.dot(ctx, wfc_ref[...], preferred_element_type=jnp.float32)
              + vec_ref[0:1, :])                        # [B, M]  (+ bfc)

    # ---- residual + LayerNorm ----
    xres = fc_out + x[0:B, :]                           # residual = q rows
    mean = jnp.mean(xres, axis=-1, keepdims=True)
    var = jnp.mean((xres - mean) ** 2, axis=-1, keepdims=True)
    x_ln = ((xres - mean) * lax.rsqrt(var + 1e-5)
            * vec_ref[1:2, :] + vec_ref[2:3, :])        # gamma / beta

    # ---- MergeLayer: fc1(cat([x_ln, src], 1)) -> relu -> fc2 ----
    # (concat avoided: w1 row-split + w2 packed into one wm block)
    w1a = wm_ref[0:M, :]                                # [M, D]
    w1b = wm_ref[M:M + D, :]                            # [D, D]
    w2 = wm_ref[M + D:M + 2 * D, :]                     # [D, D]
    h1 = (jnp.dot(x_ln, w1a, preferred_element_type=jnp.float32)
          + jnp.dot(src_ref[...], w1b, preferred_element_type=jnp.float32)
          + vec_ref[3:4, 0:D])                          # + b1
    h1 = jnp.maximum(h1, 0.0)
    out_ref[...] = (jnp.dot(h1, w2, preferred_element_type=jnp.float32)
                    + vec_ref[4:5, 0:D])                # + b2


def init_params(key, feat_dim, n_head=2):
    D = feat_dim
    M = 3 * D                      # model_dim = feat_dim + edge_dim + time_dim
    assert M % n_head == 0
    dk = M // n_head
    ks = jax.random.split(key, 9)
    s = 0.1
    wq = jax.random.normal(ks[0], (M, n_head * dk), jnp.float32) * s
    wk = jax.random.normal(ks[1], (M, n_head * dk), jnp.float32) * s
    wv = jax.random.normal(ks[2], (M, n_head * dk), jnp.float32) * s
    wfc = jax.random.normal(ks[3], (n_head * dk, M), jnp.float32) * s
    bfc = jax.random.normal(ks[4], (1, M), jnp.float32) * s
    gamma = jnp.ones((1, M), jnp.float32)
    beta = jnp.zeros((1, M), jnp.float32)
    w1 = jax.random.normal(ks[5], (M + D, D), jnp.float32) * s
    b1 = jax.random.normal(ks[6], (1, D), jnp.float32) * s
    w2 = jax.random.normal(ks[7], (D, D), jnp.float32) * s
    b2 = jax.random.normal(ks[8], (1, D), jnp.float32) * s

    # ---- one-time parameter prep for the Pallas kernel (hoisted out of the
    #      per-call forward, per perf review) ----
    scale = 1.0 / float(np.sqrt(dk))
    wqkv = jnp.concatenate([wq * scale, wk, wv], axis=1)     # [M, 3*H*dk]
    wmerge = jnp.concatenate([w1, w2], axis=0)               # [M + 2D, D]
    vecs = jnp.zeros((5, M), jnp.float32)
    vecs = vecs.at[0].set(bfc[0])
    vecs = vecs.at[1].set(gamma[0])
    vecs = vecs.at[2].set(beta[0])
    vecs = vecs.at[3, :D].set(b1[0])
    vecs = vecs.at[4, :D].set(b2[0])

    return dict(
        # raw params (used by the pure-JAX reference)
        wq=wq, wk=wk, wv=wv, wfc=wfc, bfc=bfc, gamma=gamma, beta=beta,
        w1=w1, b1=b1, w2=w2, b2=b2,
        # pre-packed params (used by the Pallas kernel)
        wqkv=wqkv, wmerge=wmerge, vecs=vecs,
        M=M, H=n_head, dk=dk,
    )


def attn_model_forward(params, src, src_t, seq, seq_t, seq_e, mask):
    B, D = src.shape
    _, N, _ = seq.shape
    M, H, dk = params["M"], params["H"], params["dk"]
    Rq = ((B + 7) // 8) * 8       # pad q block so k rows start sublane-aligned

    # -------- activation glue only (all weight prep hoisted) --------
    q2d = jnp.concatenate(
        [src, jnp.zeros((B, seq_e.shape[2]), jnp.float32), src_t], axis=1)  # [B, M]
    k2d = jnp.concatenate([seq, seq_e, seq_t], axis=2).reshape(B * N, M)    # [B*N, M]
    pieces = [q2d]
    if Rq > B:
        pieces.append(jnp.zeros((Rq - B, M), jnp.float32))
    pieces.append(k2d)
    x_stack = jnp.concatenate(pieces, axis=0)                               # [Rq+B*N, M]
    mask_f = mask.astype(jnp.float32)                                       # [B, N]

    kernel = functools.partial(attn_model_kernel,
                               B=B, N=N, D=D, M=M, H=H, dk=dk, Rq=Rq)
    vmem = pl.BlockSpec(memory_space=pltpu.MemorySpace.VMEM)
    inputs = (x_stack, mask_f, src,
              params["wqkv"], params["wfc"], params["wmerge"], params["vecs"])

    out, attn = pl.pallas_call(
        kernel,
        out_shape=(jax.ShapeDtypeStruct((B, D), jnp.float32),
                   jax.ShapeDtypeStruct((H * B, N), jnp.float32)),
        in_specs=[vmem] * len(inputs),
        out_specs=(vmem, vmem),
    )(*inputs)
    return out, attn


def reference_forward(params, src, src_t, seq, seq_t, seq_e, mask):
    """Pure-JAX reference mirroring the PyTorch forward (eval mode)."""
    B, D = src.shape
    _, N, _ = seq.shape
    M, H, dk = params["M"], params["H"], params["dk"]

    q = jnp.concatenate([src[:, None, :],
                         jnp.zeros((B, 1, seq_e.shape[2]), jnp.float32),
                         src_t[:, None, :]], axis=2)              # [B, 1, M]
    k = jnp.concatenate([seq, seq_e, seq_t], axis=2)              # [B, N, M]
    residual = q

    qp = (q @ params["wq"]).reshape(B, 1, H, dk).transpose(2, 0, 1, 3).reshape(H * B, 1, dk)
    kp = (k @ params["wk"]).reshape(B, N, H, dk).transpose(2, 0, 1, 3).reshape(H * B, N, dk)
    vp = (k @ params["wv"]).reshape(B, N, H, dk).transpose(2, 0, 1, 3).reshape(H * B, N, dk)

    mask3 = jnp.tile(mask[:, None, :], (H, 1, 1))                 # [H*B, 1, N]
    scores = jnp.einsum("hqd,hkd->hqk", qp, kp) / np.sqrt(dk)
    scores = jnp.where(mask3, -1e10, scores)
    attn = jax.nn.softmax(scores, axis=2)                         # [H*B, 1, N]
    ctx = jnp.einsum("hqk,hkd->hqd", attn, vp)                    # [H*B, 1, dk]
    ctx = ctx.reshape(H, B, 1, dk).transpose(1, 2, 0, 3).reshape(B, 1, H * dk)

    o = ctx @ params["wfc"] + params["bfc"]
    x = o + residual
    mean = jnp.mean(x, axis=-1, keepdims=True)
    var = jnp.mean((x - mean) ** 2, axis=-1, keepdims=True)
    x_ln = (x - mean) / jnp.sqrt(var + 1e-5) * params["gamma"] + params["beta"]
    x_ln = x_ln.reshape(B, M)

    cat = jnp.concatenate([x_ln, src], axis=1)
    h1 = jnp.maximum(cat @ params["w1"] + params["b1"], 0.0)
    out = h1 @ params["w2"] + params["b2"]
    return out, attn.reshape(H * B, N)


if __name__ == "__main__":
    B, N, feat_dim, n_head = 2, 8, 16, 2   # model_dim = 3*16 = 48, d_k = 24

    key = jax.random.PRNGKey(0)
    k_in, k_par = jax.random.split(key)
    ks = jax.random.split(k_in, 6)
    src = jax.random.normal(ks[0], (B, feat_dim), jnp.float32)
    src_t = jax.random.normal(ks[1], (B, feat_dim), jnp.float32)
    seq = jax.random.normal(ks[2], (B, N, feat_dim), jnp.float32)
    seq_t = jax.random.normal(ks[3], (B, N, feat_dim), jnp.float32)
    seq_e = jax.random.normal(ks[4], (B, N, feat_dim), jnp.float32)
    mask = jax.random.uniform(ks[5], (B, N)) < 0.3                # True == null entry

    params = init_params(k_par, feat_dim, n_head)

    out, attn = attn_model_forward(params, src, src_t, seq, seq_t, seq_e, mask)
    jax.block_until_ready((out, attn))

    ref_out, ref_attn = reference_forward(params, src, src_t, seq, seq_t, seq_e, mask)
    np.testing.assert_allclose(np.asarray(out), np.asarray(ref_out), rtol=1e-3, atol=1e-3)
    np.testing.assert_allclose(np.asarray(attn), np.asarray(ref_attn), rtol=1e-3, atol=1e-3)

    print("KERNEL_OK")
</pallas_src>

<mosaic_0001>
module attributes {stable_mosaic.version = 11 : i64} {
  func.func @attn_model_kernel(%arg0: memref<24x48xf32, #tpu.memory_space<vmem>>, %arg1: memref<2x8xf32, #tpu.memory_space<vmem>>, %arg2: memref<2x16xf32, #tpu.memory_space<vmem>>, %arg3: memref<48x144xf32, #tpu.memory_space<vmem>>, %arg4: memref<48x48xf32, #tpu.memory_space<vmem>>, %arg5: memref<80x16xf32, #tpu.memory_space<vmem>>, %arg6: memref<5x48xf32, #tpu.memory_space<vmem>>, %arg7: memref<2x16xf32, #tpu.memory_space<vmem>>, %arg8: memref<4x8xf32, #tpu.memory_space<vmem>>) attributes {dimension_semantics = [], scalar_prefetch = 0 : i64, scratch_operands = 0 : i64, tpu.core_type = #tpu.core_type<tc>} {
    %c0 = arith.constant 0 : index
    %c0_0 = arith.constant 0 : index
    %0 = vector.load %arg0[%c0, %c0_0] : memref<24x48xf32, #tpu.memory_space<vmem>>, vector<24x48xf32>
    %c0_1 = arith.constant 0 : index
    %c0_2 = arith.constant 0 : index
    %1 = vector.load %arg3[%c0_1, %c0_2] : memref<48x144xf32, #tpu.memory_space<vmem>>, vector<48x144xf32>
    %cst = arith.constant dense<0.000000e+00> : vector<24x144xf32>
    %2 = tpu.matmul %0, %1, %cst {dimension_numbers = #tpu.dot_dimension_numbers<[1], [0], [0], [1], [0, 0, 1, 1], [], []>} : vector<24x48xf32>, vector<48x144xf32>, vector<24x144xf32> -> vector<24x144xf32>
    %c0_3 = arith.constant 0 : index
    %c0_4 = arith.constant 0 : index
    %3 = vector.load %arg1[%c0_3, %c0_4] : memref<2x8xf32, #tpu.memory_space<vmem>>, vector<2x8xf32>
    %cst_5 = arith.constant 5.000000e-01 : f32
    %4 = vector.broadcast %cst_5 : f32 to vector<2x8xf32>
    %5 = arith.cmpf ogt, %3, %4 : vector<2x8xf32>
    %6 = vector.extract_strided_slice %2 {offsets = [0, 0], sizes = [2, 24], strides = [1, 1]} : vector<24x144xf32> to vector<2x24xf32>
    %7 = vector.extract_strided_slice %2 {offsets = [8, 48], sizes = [16, 24], strides = [1, 1]} : vector<24x144xf32> to vector<16x24xf32>
    %8 = vector.shape_cast %7 : vector<16x24xf32> to vector<2x8x24xf32>
    %9 = vector.extract_strided_slice %2 {offsets = [8, 96], sizes = [16, 24], strides = [1, 1]} : vector<24x144xf32> to vector<16x24xf32>
    %10 = vector.shape_cast %9 : vector<16x24xf32> to vector<2x8x24xf32>
    %11 = vector.shape_cast %6 : vector<2x24xf32> to vector<2x1x24xf32>
    %12 = vector.broadcast %11 : vector<2x1x24xf32> to vector<2x8x24xf32>
    %13 = arith.mulf %12, %8 : vector<2x8x24xf32>
    %cst_6 = arith.constant dense<0.000000e+00> : vector<2x8xf32>
    %14 = vector.multi_reduction <add>, %13, %cst_6 [2] : vector<2x8x24xf32> to vector<2x8xf32>
    %cst_7 = arith.constant -1.000000e+10 : f32
    %15 = vector.broadcast %cst_7 : f32 to vector<2x8xf32>
    %16 = arith.select %5, %15, %14 : vector<2x8xi1>, vector<2x8xf32>
    %cst_8 = arith.constant dense<0xFF800000> : vector<2xf32>
    %17 = vector.multi_reduction <maximumf>, %16, %cst_8 [1] : vector<2x8xf32> to vector<2xf32>
    %18 = vector.shape_cast %17 : vector<2xf32> to vector<2x1xf32>
    %19 = vector.broadcast %18 : vector<2x1xf32> to vector<2x8xf32>
    %20 = arith.subf %16, %19 : vector<2x8xf32>
    %21 = math.exp %20 : vector<2x8xf32>
    %cst_9 = arith.constant dense<0.000000e+00> : vector<2xf32>
    %22 = vector.multi_reduction <add>, %21, %cst_9 [1] : vector<2x8xf32> to vector<2xf32>
    %23 = vector.shape_cast %22 : vector<2xf32> to vector<2x1xf32>
    %24 = vector.broadcast %23 : vector<2x1xf32> to vector<2x8xf32>
    %25 = arith.divf %21, %24 : vector<2x8xf32>
    %26 = vector.shape_cast %25 : vector<2x8xf32> to vector<2x8x1xf32>
    %27 = vector.broadcast %26 : vector<2x8x1xf32> to vector<2x8x24xf32>
    %28 = arith.mulf %27, %10 : vector<2x8x24xf32>
    %cst_10 = arith.constant dense<0.000000e+00> : vector<2x24xf32>
    %29 = vector.multi_reduction <add>, %28, %cst_10 [1] : vector<2x8x24xf32> to vector<2x24xf32>
    %30 = vector.extract_strided_slice %2 {offsets = [0, 24], sizes = [2, 24], strides = [1, 1]} : vector<24x144xf32> to vector<2x24xf32>
    %31 = vector.extract_strided_slice %2 {offsets = [8, 72], sizes = [16, 24], strides = [1, 1]} : vector<24x144xf32> to vector<16x24xf32>
    %32 = vector.shape_cast %31 : vector<16x24xf32> to vector<2x8x24xf32>
    %33 = vector.extract_strided_slice %2 {offsets = [8, 120], sizes = [16, 24], strides = [1, 1]} : vector<24x144xf32> to vector<16x24xf32>
    %34 = vector.shape_cast %33 : vector<16x24xf32> to vector<2x8x24xf32>
    %35 = vector.shape_cast %30 : vector<2x24xf32> to vector<2x1x24xf32>
    %36 = vector.broadcast %35 : vector<2x1x24xf32> to vector<2x8x24xf32>
    %37 = arith.mulf %36, %32 : vector<2x8x24xf32>
    %cst_11 = arith.constant dense<0.000000e+00> : vector<2x8xf32>
    %38 = vector.multi_reduction <add>, %37, %cst_11 [2] : vector<2x8x24xf32> to vector<2x8xf32>
    %cst_12 = arith.constant -1.000000e+10 : f32
    %39 = vector.broadcast %cst_12 : f32 to vector<2x8xf32>
    %40 = arith.select %5, %39, %38 : vector<2x8xi1>, vector<2x8xf32>
    %cst_13 = arith.constant dense<0xFF800000> : vector<2xf32>
    %41 = vector.multi_reduction <maximumf>, %40, %cst_13 [1] : vector<2x8xf32> to vector<2xf32>
    %42 = vector.shape_cast %41 : vector<2xf32> to vector<2x1xf32>
    %43 = vector.broadcast %42 : vector<2x1xf32> to vector<2x8xf32>
    %44 = arith.subf %40, %43 : vector<2x8xf32>
    %45 = math.exp %44 : vector<2x8xf32>
    %cst_14 = arith.constant dense<0.000000e+00> : vector<2xf32>
    %46 = vector.multi_reduction <add>, %45, %cst_14 [1] : vector<2x8xf32> to vector<2xf32>
    %47 = vector.shape_cast %46 : vector<2xf32> to vector<2x1xf32>
    %48 = vector.broadcast %47 : vector<2x1xf32> to vector<2x8xf32>
    %49 = arith.divf %45, %48 : vector<2x8xf32>
    %50 = vector.shape_cast %49 : vector<2x8xf32> to vector<2x8x1xf32>
    %51 = vector.broadcast %50 : vector<2x8x1xf32> to vector<2x8x24xf32>
    %52 = arith.mulf %51, %34 : vector<2x8x24xf32>
    %cst_15 = arith.constant dense<0.000000e+00> : vector<2x24xf32>
    %53 = vector.multi_reduction <add>, %52, %cst_15 [1] : vector<2x8x24xf32> to vector<2x24xf32>
    %54 = tpu.concatenate %25, %49 in 0 : vector<2x8xf32>, vector<2x8xf32> -> vector<4x8xf32>
    %c0_16 = arith.constant 0 : index
    %c0_17 = arith.constant 0 : index
    %55 = vector.load %arg8[%c0_16, %c0_17] : memref<4x8xf32, #tpu.memory_space<vmem>>, vector<4x8xf32>
    tpu.vector_store %arg8[%c0_16, %c0_17], %54 {strides = array<i32>} : memref<4x8xf32, #tpu.memory_space<vmem>>, vector<4x8xf32>,
    %56 = tpu.concatenate %29, %53 in 1 : vector<2x24xf32>, vector<2x24xf32> -> vector<2x48xf32>
    %c0_18 = arith.constant 0 : index
    %c0_19 = arith.constant 0 : index
    %57 = vector.load %arg4[%c0_18, %c0_19] : memref<48x48xf32, #tpu.memory_space<vmem>>, vector<48x48xf32>
    %cst_20 = arith.constant dense<0.000000e+00> : vector<2x48xf32>
    %58 = tpu.matmul %56, %57, %cst_20 {dimension_numbers = #tpu.dot_dimension_numbers<[1], [0], [0], [1], [0, 0, 1, 1], [], []>} : vector<2x48xf32>, vector<48x48xf32>, vector<2x48xf32> -> vector<2x48xf32>
    %c0_21 = arith.constant 0 : index
    %c0_22 = arith.constant 0 : index
    %59 = vector.load %arg6[%c0_21, %c0_22] : memref<5x48xf32, #tpu.memory_space<vmem>>, vector<1x48xf32>
    %60 = vector.broadcast %59 : vector<1x48xf32> to vector<2x48xf32>
    %61 = arith.addf %58, %60 : vector<2x48xf32>
    %62 = vector.extract_strided_slice %0 {offsets = [0, 0], sizes = [2, 48], strides = [1, 1]} : vector<24x48xf32> to vector<2x48xf32>
    %63 = arith.addf %61, %62 : vector<2x48xf32>
    %cst_23 = arith.constant dense<0.000000e+00> : vector<2xf32>
    %64 = vector.multi_reduction <add>, %63, %cst_23 [1] : vector<2x48xf32> to vector<2xf32>
    %65 = vector.shape_cast %64 : vector<2xf32> to vector<2x1xf32>
    %cst_24 = arith.constant 4.800000e+01 : f32
    %66 = vector.broadcast %cst_24 : f32 to vector<2x1xf32>
    %67 = arith.divf %65, %66 : vector<2x1xf32>
    %68 = vector.broadcast %67 : vector<2x1xf32> to vector<2x48xf32>
    %69 = arith.subf %63, %68 : vector<2x48xf32>
    %70 = arith.mulf %69, %69 : vector<2x48xf32>
    %cst_25 = arith.constant dense<0.000000e+00> : vector<2xf32>
    %71 = vector.multi_reduction <add>, %70, %cst_25 [1] : vector<2x48xf32> to vector<2xf32>
    %72 = vector.shape_cast %71 : vector<2xf32> to vector<2x1xf32>
    %cst_26 = arith.constant 4.800000e+01 : f32
    %73 = vector.broadcast %cst_26 : f32 to vector<2x1xf32>
    %74 = arith.divf %72, %73 : vector<2x1xf32>
    %75 = vector.broadcast %67 : vector<2x1xf32> to vector<2x48xf32>
    %76 = arith.subf %63, %75 : vector<2x48xf32>
    %cst_27 = arith.constant 9.99999974E-6 : f32
    %77 = vector.broadcast %cst_27 : f32 to vector<2x1xf32>
    %78 = arith.addf %74, %77 : vector<2x1xf32>
    %79 = math.rsqrt %78 : vector<2x1xf32>
    %80 = vector.broadcast %79 : vector<2x1xf32> to vector<2x48xf32>
    %81 = arith.mulf %76, %80 : vector<2x48xf32>
    %c1 = arith.constant 1 : index
    %c0_28 = arith.constant 0 : index
    %82 = vector.load %arg6[%c1, %c0_28] : memref<5x48xf32, #tpu.memory_space<vmem>>, vector<1x48xf32>
    %83 = vector.broadcast %82 : vector<1x48xf32> to vector<2x48xf32>
    %84 = arith.mulf %81, %83 : vector<2x48xf32>
    %c2 = arith.constant 2 : index
    %c0_29 = arith.constant 0 : index
    %85 = vector.load %arg6[%c2, %c0_29] : memref<5x48xf32, #tpu.memory_space<vmem>>, vector<1x48xf32>
    %86 = vector.broadcast %85 : vector<1x48xf32> to vector<2x48xf32>
    %87 = arith.addf %84, %86 : vector<2x48xf32>
    %c0_30 = arith.constant 0 : index
    %c0_31 = arith.constant 0 : index
    %88 = vector.load %arg5[%c0_30, %c0_31] : memref<80x16xf32, #tpu.memory_space<vmem>>, vector<48x16xf32>
    %c48 = arith.constant 48 : index
    %c0_32 = arith.constant 0 : index
    %89 = vector.load %arg5[%c48, %c0_32] : memref<80x16xf32, #tpu.memory_space<vmem>>, vector<16x16xf32>
    %c64 = arith.constant 64 : index
    %c0_33 = arith.constant 0 : index
    %90 = vector.load %arg5[%c64, %c0_33] : memref<80x16xf32, #tpu.memory_space<vmem>>, vector<16x16xf32>
    %cst_34 = arith.constant dense<0.000000e+00> : vector<2x16xf32>
    %91 = tpu.matmul %87, %88, %cst_34 {dimension_numbers = #tpu.dot_dimension_numbers<[1], [0], [0], [1], [0, 0, 1, 1], [], []>} : vector<2x48xf32>, vector<48x16xf32>, vector<2x16xf32> -> vector<2x16xf32>
    %c0_35 = arith.constant 0 : index
    %c0_36 = arith.constant 0 : index
    %92 = vector.load %arg2[%c0_35, %c0_36] : memref<2x16xf32, #tpu.memory_space<vmem>>, vector<2x16xf32>
    %cst_37 = arith.constant dense<0.000000e+00> : vector<2x16xf32>
    %93 = tpu.matmul %92, %89, %cst_37 {dimension_numbers = #tpu.dot_dimension_numbers<[1], [0], [0], [1], [0, 0, 1, 1], [], []>} : vector<2x16xf32>, vector<16x16xf32>, vector<2x16xf32> -> vector<2x16xf32>
    %94 = arith.addf %91, %93 : vector<2x16xf32>
    %c3 = arith.constant 3 : index
    %c0_38 = arith.constant 0 : index
    %95 = vector.load %arg6[%c3, %c0_38] : memref<5x48xf32, #tpu.memory_space<vmem>>, vector<1x16xf32>
    %96 = vector.broadcast %95 : vector<1x16xf32> to vector<2x16xf32>
    %97 = arith.addf %94, %96 : vector<2x16xf32>
    %cst_39 = arith.constant 0.000000e+00 : f32
    %98 = vector.broadcast %cst_39 : f32 to vector<2x16xf32>
    %99 = arith.maximumf %97, %98 : vector<2x16xf32>
    %cst_40 = arith.constant dense<0.000000e+00> : vector<2x16xf32>
    %100 = tpu.matmul %99, %90, %cst_40 {dimension_numbers = #tpu.dot_dimension_numbers<[1], [0], [0], [1], [0, 0, 1, 1], [], []>} : vector<2x16xf32>, vector<16x16xf32>, vector<2x16xf32> -> vector<2x16xf32>
    %c4 = arith.constant 4 : index
    %c0_41 = arith.constant 0 : index
    %101 = vector.load %arg6[%c4, %c0_41] : memref<5x48xf32, #tpu.memory_space<vmem>>, vector<1x16xf32>
    %102 = vector.broadcast %101 : vector<1x16xf32> to vector<2x16xf32>
    %103 = arith.addf %100, %102 : vector<2x16xf32>
    %c0_42 = arith.constant 0 : index
    %c0_43 = arith.constant 0 : index
    %104 = vector.load %arg7[%c0_42, %c0_43] : memref<2x16xf32, #tpu.memory_space<vmem>>, vector<2x16xf32>
    tpu.vector_store %arg7[%c0_42, %c0_43], %103 {strides = array<i32>} : memref<2x16xf32, #tpu.memory_space<vmem>>, vector<2x16xf32>,
    return
  }
}

</mosaic_0001>

<llo_original>
// kernel: tpu_custom_call.1
$region0: #{tpu_custom_call.1}
  #allocation0 [shape = 'u32[]', space=smem, size = 0x4, offset = 0x4, fixed_abs, tag = 'smem constant byte address 0x4 - core index']
  #allocation1 [shape = 'u32[144,128]{1,0:T(1,128)}', space=vmem, size = 0x12000, scoped, tag = 'internal scratch']
  %s0 = inlined_call_operand.hbm [shape: f32[24,48], index: 0, kind: input, shape index: {}]
  %s1 = inlined_call_operand.vmem [shape: f32[2,8], index: 1, kind: input, shape index: {}]
  %s2 = inlined_call_operand.hbm [shape: f32[2,16], index: 2, kind: input, shape index: {}]
  %s3 = inlined_call_operand.vmem [shape: f32[48,144], index: 3, kind: input, shape index: {}]
  %s4 = inlined_call_operand.hbm [shape: f32[48,48], index: 4, kind: input, shape index: {}]
  %s5 = inlined_call_operand.vmem [shape: f32[80,16], index: 5, kind: input, shape index: {}]
  %s6 = inlined_call_operand.hbm [shape: f32[5,48], index: 6, kind: input, shape index: {}]
  %s7 = inlined_call_operand.hbm [shape: f32[2,16], index: 7, kind: output, shape index: {0}]
  %s8 = inlined_call_operand.hbm [shape: f32[4,8], index: 8, kind: output, shape index: {1}]
  %9 = xla_tuple %s7, %s8
  %s10 = sld [smem:[#allocation0]]
  $region62: #{tpu_custom_call.1} parent=0
    _
  %s12 = ssub.s32 1, %s10
  %s13 = scalar_select 0, %s12, %s10
  $region1: #{tpu_custom_call.1} parent=0
    #allocation2 [shape = 'u8[12288]{0}', space=vmem, size = 0x3000, scoped, tag = 'input window, operand 0, single buffered']
    #allocation3 [shape = 's32[1]{0}', space=sflag, size = 0x4, scoped, tag = 'scoped memory for tpu_custom_call.1']
    #allocation4 [shape = 's32[1]{0}', space=sflag, size = 0x4, scoped, tag = 'scoped memory for tpu_custom_call.1']
    #allocation5 [shape = 'u8[1024]{0}', space=vmem, size = 0x400, scoped, tag = 'input window, operand 2, single buffered']
    #allocation6 [shape = 's32[1]{0}', space=sflag, size = 0x4, scoped, tag = 'scoped memory for tpu_custom_call.1']
    #allocation7 [shape = 'u8[24576]{0}', space=vmem, size = 0x6000, scoped, tag = 'input window, operand 4, single buffered']
    #allocation8 [shape = 'u8[4096]{0}', space=vmem, size = 0x1000, scoped, tag = 'input window, operand 6, single buffered']
    #allocation9 [shape = 's32[1]{0}', space=sflag, size = 0x4, scoped, tag = 'scoped memory for tpu_custom_call.1']
    #allocation10 [shape = 'u8[1024]{0}', space=vmem, size = 0x400, scoped, tag = 'output window, operand 0, single buffered']
    #allocation11 [shape = 'u8[2048]{0}', space=vmem, size = 0x800, scoped, tag = 'output window, operand 1, single buffered']
    #allocation12 [shape = 's32[1]{0}', space=sflag, size = 0x4, scoped, tag = 'scoped memory for tpu_custom_call.1']
    %14 = vsyncpa [#allocation3], 0
    %15 = vsyncpa [#allocation6], 0
    %16 = vsyncpa [#allocation9], 0
    %17 = vsyncpa [#allocation4], 0
    %18 = vsyncpa [#allocation12], 0
    // Predicated region
    $region2: #{tpu_custom_call.1} parent=1 // pred_check
      _
    $region3: #{tpu_custom_call.1} parent=1 // pred_check_branch
      %20 = sbr.rel (0) target = $region5
    $region4: #{tpu_custom_call.1} parent=1 // pred_region
      %s22 = ssub.s32 384, 384
      %23 = vsyncadd [#allocation3], %s22
      %s24 = sshll.u32 [#allocation2], 4
      %s25 = int_to_ptr.vmem [resolvable:$true] %s24
      %30 = dma.hbm_to_vmem [thread:$0]  %s0, 384, %s25, [#allocation3], 128, 128, 8
    $region5: #{tpu_custom_call.1} parent=1 // pred_fallthru
      _
    // Predicated region
    $region6: #{tpu_custom_call.1} parent=1 // pred_check
      _
    $region7: #{tpu_custom_call.1} parent=1 // pred_check_branch
      %32 = sbr.rel (0) target = $region9
    $region8: #{tpu_custom_call.1} parent=1 // pred_region
      _
    $region9: #{tpu_custom_call.1} parent=1 // pred_fallthru
      _
    // Predicated region
    $region10: #{tpu_custom_call.1} parent=1 // pred_check
      _
    $region11: #{tpu_custom_call.1} parent=1 // pred_check_branch
      %34 = sbr.rel (0) target = $region13
    $region12: #{tpu_custom_call.1} parent=1 // pred_region
      %s36 = ssub.s32 32, 32
      %37 = vsyncadd [#allocation6], %s36
      %s39 = sshll.u32 [#allocation5], 4
      %s40 = int_to_ptr.vmem [resolvable:$true] %s39
      %42 = dma.hbm_to_vmem [thread:$0]  %s2, 32, %s40, [#allocation6]
    $region13: #{tpu_custom_call.1} parent=1 // pred_fallthru
      _
    // Predicated region
    $region14: #{tpu_custom_call.1} parent=1 // pred_check
      _
    $region15: #{tpu_custom_call.1} parent=1 // pred_check_branch
      %44 = sbr.rel (0) target = $region17
    $region16: #{tpu_custom_call.1} parent=1 // pred_region
      _
    $region17: #{tpu_custom_call.1} parent=1 // pred_fallthru
      _
    // Predicated region
    $region18: #{tpu_custom_call.1} parent=1 // pred_check
      _
    $region19: #{tpu_custom_call.1} parent=1 // pred_check_branch
      %46 = sbr.rel (0) target = $region21
    $region20: #{tpu_custom_call.1} parent=1 // pred_region
      %s48 = ssub.s32 768, 768
      %49 = vsyncadd [#allocation6], %s48
      %s50 = sshll.u32 [#allocation7], 4
      %s51 = int_to_ptr.vmem [resolvable:$true] %s50
      %56 = dma.hbm_to_vmem [thread:$0]  %s4, 768, %s51, [#allocation6], 128, 128, 8
    $region21: #{tpu_custom_call.1} parent=1 // pred_fallthru
      _
    // Predicated region
    $region22: #{tpu_custom_call.1} parent=1 // pred_check
      _
    $region23: #{tpu_custom_call.1} parent=1 // pred_check_branch
      %58 = sbr.rel (0) target = $region25
    $region24: #{tpu_custom_call.1} parent=1 // pred_region
      _
    $region25: #{tpu_custom_call.1} parent=1 // pred_fallthru
      _
    // Predicated region
    $region26: #{tpu_custom_call.1} parent=1 // pred_check
      _
    $region27: #{tpu_custom_call.1} parent=1 // pred_check_branch
      %60 = sbr.rel (0) target = $region29
    $region28: #{tpu_custom_call.1} parent=1 // pred_region
      %s62 = ssub.s32 128, 128
      %63 = vsyncadd [#allocation9], %s62
      %s65 = sshll.u32 [#allocation8], 4
      %s66 = int_to_ptr.vmem [resolvable:$true] %s65
      %68 = dma.hbm_to_vmem [thread:$0]  %s6, 128, %s66, [#allocation9]
    $region29: #{tpu_custom_call.1} parent=1 // pred_fallthru
      _
    // Predicated region
    $region30: #{tpu_custom_call.1} parent=1 // pred_check
      _
    $region31: #{tpu_custom_call.1} parent=1 // pred_check_branch
      %70 = sbr.rel (0) target = $region33
    $region32: #{tpu_custom_call.1} parent=1 // pred_region
      %71 = dma.done [#allocation3], 384
    $region33: #{tpu_custom_call.1} parent=1 // pred_fallthru
      _
    // Predicated region
    $region34: #{tpu_custom_call.1} parent=1 // pred_check
      _
    $region35: #{tpu_custom_call.1} parent=1 // pred_check_branch
      %73 = sbr.rel (0) target = $region37
    $region36: #{tpu_custom_call.1} parent=1 // pred_region
      %74 = dma.done [#allocation6], 32
    $region37: #{tpu_custom_call.1} parent=1 // pred_fallthru
      _
    // Predicated region
    $region38: #{tpu_custom_call.1} parent=1 // pred_check
      _
    $region39: #{tpu_custom_call.1} parent=1 // pred_check_branch
      %76 = sbr.rel (0) target = $region41
    $region40: #{tpu_custom_call.1} parent=1 // pred_region
      %77 = dma.done [#allocation6], 768
    $region41: #{tpu_custom_call.1} parent=1 // pred_fallthru
      _
    // Predicated region
    $region42: #{tpu_custom_call.1} parent=1 // pred_check
      _
    $region43: #{tpu_custom_call.1} parent=1 // pred_check_branch
      %79 = sbr.rel (0) target = $region45
    $region44: #{tpu_custom_call.1} parent=1 // pred_region
      %80 = dma.done [#allocation9], 128
    $region45: #{tpu_custom_call.1} parent=1 // pred_fallthru
      _
    %v81 = vld [vmem:[#allocation2] sm:$0xff]
    %v82 = vld [vmem:[#allocation2 + $0x8] sm:$0xff]
    %v83 = vld [vmem:[#allocation2 + $0x10] sm:$0xff]
    %v84 = vld [vmem:[%s3] sm:$0xff]
    %v85 = vld [vmem:[%s3 + $0x8] sm:$0xff]
    %v86 = vld [vmem:[%s3 + $0x10] sm:$0xff]
    %v87 = vld [vmem:[%s3 + $0x18] sm:$0xff]
    %v88 = vld [vmem:[%s3 + $0x20] sm:$0xff]
    %v89 = vld [vmem:[%s3 + $0x28] sm:$0xff]
    %v90 = vld [vmem:[%s3 + $0x30] sm:$0xff]
    %v91 = vld [vmem:[%s3 + $0x38] sm:$0xff]
    %v92 = vld [vmem:[%s3 + $0x40] sm:$0xff]
    %v93 = vld [vmem:[%s3 + $0x48] sm:$0xff]
    %v94 = vld [vmem:[%s3 + $0x50] sm:$0xff]
    %v95 = vld [vmem:[%s3 + $0x58] sm:$0xff]
    %vm96 = vcmask 392192
    %v98 = vsel %vm96, %v81, 0
    %v101 = vsel %vm96, %v82, 0
    %v104 = vsel %vm96, %v83, 0
    %106 = vmatprep.subr.mxu0 %v85
    %107 = vmatpush1.msra.mxu0 %v84
    %108 = vmatprep.subr.mxu0 %v87
    %109 = vmatpush1.msra.mxu0 %v86
    %110 = vmatprep.subr.mxu0 %v89
    %111 = vmatpush1.msra.mxu0 %v88
    %112 = vmatprep.subr.mxu0 %v91
    %113 = vmatpush1.msra.mxu0 %v90
    %114 = vmatprep.subr.mxu0 %v93
    %115 = vmatpush1.msra.mxu0 %v92
    %116 = vmatprep.subr.mxu0 %v95
    %117 = vmatpush1.msra.mxu0 %v94
    %118 = vmatprep.subr.mxu0 0.0
    %119 = vmatpush1.msra.mxu0 0.0
    %120 = vmatprep.subr.mxu0 0.0
    %121 = vmatpush1.msra.mxu0 0.0
    %122 = vmatprep.subr.mxu0 0.0
    %123 = vmatpush1.msra.mxu0 0.0
    %124 = vmatprep.subr.mxu0 0.0
    %125 = vmatpush1.msra.mxu0 0.0
    %126 = vmatprep.subr.mxu0 0.0
    %127 = vmatpush1.msra.mxu0 0.0
    %128 = vmatprep.subr.mxu0 0.0
    %129 = vmatpush1.msra.mxu0 0.0
    %130 = vmatprep.subr.mxu0 0.0
    %131 = vmatpush1.msra.mxu0 0.0
    %132 = vmatprep.subr.mxu0 0.0
    %133 = vmatpush1.msra.mxu0 0.0
    %134 = vmatprep.subr.mxu0 0.0
    %135 = vmatpush1.msra.mxu0 0.0
    %136 = vmatprep.subr.mxu0 0.0
    %137 = vmatpush1.msra.mxu0 0.0
    %138 = vmatprep.subr.mxu0 0.0
    %139 = vmatpush1.msra.mxu0 0.0
    %140 = vmatprep.subr.mxu0 0.0
    %141 = vmatpush1.msra.mxu0 0.0
    %142 = vmatprep.subr.mxu0 0.0
    %143 = vmatpush1.msra.mxu0 0.0
    %144 = vmatprep.subr.mxu0 0.0
    %145 = vmatpush1.msra.mxu0 0.0
    %146 = vmatprep.subr.mxu0 0.0
    %147 = vmatpush1.msra.mxu0 0.0
    %148 = vmatprep.subr.mxu0 0.0
    %149 = vmatpush1.msra.mxu0 0.0
    %150 = vmatprep.subr.mxu0 0.0
    %151 = vmatpush1.msra.mxu0 0.0
    %152 = vmatprep.subr.mxu0 0.0
    %153 = vmatpush1.msra.mxu0 0.0
    %154 = vmatprep.subr.mxu0 0.0
    %155 = vmatpush1.msra.mxu0 0.0
    %156 = vmatprep.subr.mxu0 0.0
    %157 = vmatpush1.msra.mxu0 0.0
    %158 = vmatprep.subr.mxu0 0.0
    %159 = vmatpush1.msra.mxu0 0.0
    %160 = vmatprep.subr.mxu0 0.0
    %161 = vmatpush1.msra.mxu0 0.0
    %162 = vmatprep.subr.mxu0 0.0
    %163 = vmatpush1.msra.mxu0 0.0
    %164 = vmatprep.subr.mxu0 0.0
    %165 = vmatpush1.msra.mxu0 0.0
    %166 = vmatprep.subr.mxu0 0.0
    %167 = vmatpush1.msra.mxu0 0.0
    %168 = vmatprep.subr.mxu0 0.0
    %169 = vmatpush1.msra.mxu0 0.0
    %170 = vmatprep.mubr.f32.mxu0 0.0
    %171 = vmatmul.mubr.f32.gmra.mrb[0].mxu0 %v98
    %v172 = vpop.f32.mrb[0].mxu0
    %v173 = vadd.f32 0.0, %v172
    %v174 = vpop.f32.mrb[0].mxu0
    %175 = vmatprep.mubr.f32.mxu0 0.0
    %176 = vmatmul.mubr.f32.gmra.mrb[0].mxu0 %v101
    %v177 = vpop.f32.mrb[0].mxu0
    %v178 = vadd.f32 0.0, %v177
    %v179 = vpop.f32.mrb[0].mxu0
    %v180 = vadd.f32 0.0, %v179
    %181 = vmatprep.mubr.f32.mxu0 0.0
    %182 = vmatmul.mubr.f32.gmra.mrb[0].mxu0 %v104
    %v183 = vpop.f32.mrb[0].mxu0
    %v184 = vadd.f32 0.0, %v183
    %v185 = vpop.f32.mrb[0].mxu0
    %v186 = vadd.f32 0.0, %v185
    %187 = vdwg.mxu0
    %v188 = vld [vmem:[%s1] sm:$0x3]
    %vm189 = vcmp.gt.f32.partialorder %v188, 0.5
    %v192 = vunpack.c.l.s4 1966171168
    %v193 = vunpack.c.0.s8 %v192
    %v194 = vlaneseq
    %v195 = vshrl.u32 %v194, 7
    %v196 = vsub.s32 %v193, %v195
    %v197 = vrot.slane %v173, %v196
    %v198 = vcombine.high %v197, %v197
    %v200 = vunpack.c.l.s4 1966171168
    %v201 = vunpack.c.0.s8 %v200
    %v202 = vlaneseq
    %v203 = vshrl.u32 %v202, 7
    %v204 = vsub.s32 %v201, %v203
    %v205 = vrot.slane %v197, %v204
    %v207 = vunpack.c.l.s4 1966171168
    %v208 = vunpack.c.0.s8 %v207
    %v209 = vlaneseq
    %v210 = vshrl.u32 %v209, 7
    %v211 = vsub.s32 %v208, %v210
    %v212 = vrot.slane %v198, %v211
    %v213 = vlaneseq
    %v214 = vshrl.u32 %v213, 7
    %v215 = vsub.s32 0, %v214
    %v216 = vrot.slane %v205, %v215
    %v217 = vlaneseq
    %v218 = vshrl.u32 %v217, 7
    %v219 = vsub.s32 0, %v218
    %v220 = vrot.slane %v212, %v219
    %225 = vrot.lane.b32.xlu0 %v178, 80
    %v226 = vpop.permute.xlu0 %225
    %227 = vrot.lane.b32.xlu0 %v184, 80
    %v228 = vpop.permute.xlu0 %227
    %v231 = vmul.f32 %v216, %v226
    %v232 = vmul.f32 %v220, %v228
    %vm233 = vcmask 195584
    %v234 = vsel %vm233, %v231, 0.0
    %235 = vadd.xlane.f32.xlu0 %v234
    %v236 = vpop.xlane.xlu0 %235
    %v237 = vsel %vm233, %v232, 0.0
    %238 = vadd.xlane.f32.xlu0 %v237
    %v239 = vpop.xlane.xlu0 %238
    %v242 = vlaneseq
    %v243 = vand.u32 %v242, 127
    %v244 = vlaneseq
    %v245 = vshrl.u32 %v244, 7
    %v246 = vsub.s32 %v243, %v245
    %v247 = vrot.slane %v236, %v246
    %v248 = vlaneseq
    %v249 = vshrl.u32 %v248, 7
    %v250 = vsub.s32 %v243, %v249
    %v251 = vrot.slane %v239, %v250
    %vm252 = vcmask 1041409
    %v253 = vsel %vm252, %v251, %v247
    %v255 = vsel %vm189, -1e+10, %v253
    %vm256 = vcmask 58368
    %v257 = vsel %vm256, %v255, -inf
    %258 = vmax.xlane.f32.xlu0 %v257
    %v259 = vpop.xlane.xlu0 %258
    %v260 = vsub.f32 %v255, %v259
    %v261 = vmul.f32 %v260, 1.442695
    %v262 = vpow.pop %v261
    %v263 = vsel %vm256, %v262, 0.0
    %264 = vadd.xlane.f32.xlu0 %v263
    %v265 = vpop.xlane.xlu0 %264
    %v266 = vrcp.pop %v265
    %v267 = vmul.f32 %v262, %v266
    %v268 = vlaneseq
    %v269 = vshrl.u32 %v268, 7
    %v270 = vsub.s32 0, %v269
    %v271 = vrot.slane %v267, %v270
    %273 = vbcast.lane.b32.xlu0 %v271, 256
    %v274 = vpop.permute.xlu0 %273
    %v275 = vlaneseq
    %v276 = vshrl.u32 %v275, 7
    %v277 = vsub.s32 1, %v276
    %v278 = vrot.slane %v267, %v277
    %280 = vbcast.lane.b32.xlu0 %v278, 256
    %v281 = vpop.permute.xlu0 %280
    %v282 = vmul.f32 %v274, %v178
    %v283 = vmul.f32 %v281, %v184
    %vm284 = vcmask 982784
    %v285 = vsel %vm284, %v282, 0.0
    %v286 = vrot.slane %v285, 4
    %v287 = vadd.f32 %v285, %v286
    %v288 = vrot.slane %v287, 2
    %v289 = vadd.f32 %v287, %v288
    %v290 = vrot.slane %v289, 1
    %v291 = vadd.f32 %v289, %v290
    %v292 = vsel %vm284, %v283, 0.0
    %v293 = vrot.slane %v292, 4
    %v294 = vadd.f32 %v292, %v293
    %v295 = vrot.slane %v294, 2
    %v296 = vadd.f32 %v294, %v295
    %v297 = vrot.slane %v296, 1
    %v298 = vadd.f32 %v296, %v297
    %301 = vrot.lane.b32.xlu0 %v231, 104
    %v302 = vpop.permute.xlu0 %301
    %303 = vrot.lane.b32.xlu0 %v232, 104
    %v304 = vpop.permute.xlu0 %303
    %v307 = vsel %vm233, %v302, 0.0
    %308 = vadd.xlane.f32.xlu0 %v307
    %v309 = vpop.xlane.xlu0 %308
    %v310 = vsel %vm233, %v304, 0.0
    %311 = vadd.xlane.f32.xlu0 %v310
    %v312 = vpop.xlane.xlu0 %311
    %v315 = vlaneseq
    %v316 = vshrl.u32 %v315, 7
    %v317 = vsub.s32 %v243, %v316
    %v318 = vrot.slane %v309, %v317
    %v319 = vlaneseq
    %v320 = vshrl.u32 %v319, 7
    %v321 = vsub.s32 %v243, %v320
    %v322 = vrot.slane %v312, %v321
    %v323 = vsel %vm252, %v322, %v318
    %v325 = vsel %vm189, -1e+10, %v323
    %v326 = vsel %vm256, %v325, -inf
    %327 = vmax.xlane.f32.xlu0 %v326
    %v328 = vpop.xlane.xlu0 %327
    %v329 = vsub.f32 %v325, %v328
    %v330 = vmul.f32 %v329, 1.442695
    %v331 = vpow.pop %v330
    %v332 = vsel %vm256, %v331, 0.0
    %333 = vadd.xlane.f32.xlu0 %v332
    %v334 = vpop.xlane.xlu0 %333
    %v335 = vrcp.pop %v334
    %v336 = vmul.f32 %v331, %v335
    %v337 = vlaneseq
    %v338 = vshrl.u32 %v337, 7
    %v339 = vsub.s32 0, %v338
    %v340 = vrot.slane %v336, %v339
    %342 = vbcast.lane.b32.xlu0 %v340, 256
    %v343 = vpop.permute.xlu0 %342
    %v344 = vlaneseq
    %v345 = vshrl.u32 %v344, 7
    %v346 = vsub.s32 1, %v345
    %v347 = vrot.slane %v336, %v346
    %349 = vbcast.lane.b32.xlu0 %v347, 256
    %v350 = vpop.permute.xlu0 %349
    %v351 = vmul.f32 %v343, %v178
    %v352 = vmul.f32 %v343, %v180
    %v353 = vmul.f32 %v350, %v184
    %v354 = vmul.f32 %v350, %v186
    %vm355 = vcmask 1048512
    %v356 = vsel %vm355, %v351, 0.0
    %v357 = vrot.slane %v356, 4
    %v358 = vadd.f32 %v356, %v357
    %v359 = vrot.slane %v358, 2
    %v360 = vadd.f32 %v358, %v359
    %v361 = vrot.slane %v360, 1
    %v362 = vadd.f32 %v360, %v361
    %vm363 = vcmask 130048
    %v364 = vsel %vm363, %v352, 0.0
    %v365 = vrot.slane %v364, 4
    %v366 = vadd.f32 %v364, %v365
    %v367 = vrot.slane %v366, 2
    %v368 = vadd.f32 %v366, %v367
    %v369 = vrot.slane %v368, 1
    %v370 = vadd.f32 %v368, %v369
    %v371 = vsel %vm355, %v353, 0.0
    %v372 = vrot.slane %v371, 4
    %v373 = vadd.f32 %v371, %v372
    %v374 = vrot.slane %v373, 2
    %v375 = vadd.f32 %v373, %v374
    %v376 = vrot.slane %v375, 1
    %v377 = vadd.f32 %v375, %v376
    %v378 = vsel %vm363, %v354, 0.0
    %v379 = vrot.slane %v378, 4
    %v380 = vadd.f32 %v378, %v379
    %v381 = vrot.slane %v380, 2
    %v382 = vadd.f32 %v380, %v381
    %v383 = vrot.slane %v382, 1
    %v384 = vadd.f32 %v382, %v383
    %v386 = vrot.slane %v336, 6
    %vm388 = vcmask 1041408
    %v389 = vsel %vm388, %v267, %v386
    %vm390 = vcmask 60416
    %391 = vst.msk [vmem:[#allocation11] sm:$0xf] %vm390, %v389
    %v394 = vsel %vm252, %v298, %v291
    %395 = vrot.lane.b32.xlu0 %v394, 32
    %v396 = vpop.permute.xlu0 %395
    %v402 = vsel %vm252, %v377, %v362
    %v403 = vsel %vm252, %v384, %v370
    %404 = vrot.lane.b32.xlu0 %v402, 32
    %v405 = vpop.permute.xlu0 %404
    %406 = vrot.lane.b32.xlu0 %v403, 32
    %v407 = vpop.permute.xlu0 %406
    %vm408 = vcmask 261120
    %v409 = vsel %vm408, %v405, %v407
    %v411 = vsel %vm233, %v396, %v409
    %v412 = vld [vmem:[#allocation7] sm:$0xff]
    %v413 = vld [vmem:[#allocation7 + $0x8] sm:$0xff]
    %v414 = vld [vmem:[#allocation7 + $0x10] sm:$0xff]
    %v415 = vld [vmem:[#allocation7 + $0x18] sm:$0xff]
    %v416 = vld [vmem:[#allocation7 + $0x20] sm:$0xff]
    %v417 = vld [vmem:[#allocation7 + $0x28] sm:$0xff]
    %v418 = vld [vmem:[#allocation8] sm:$0x1]
    %v419 = vlaneseq
    %v420 = vshrl.u32 %v419, 7
    %v421 = vsub.s32 0, %v420
    %v422 = vrot.slane %v418, %v421
    %v424 = vsel %vm96, %v411, 0
    %426 = vmatprep.subr.mxu0 0.0
    %427 = vmatpush1.msra.mxu0 %v412
    %428 = vmatprep.subr.mxu0 0.0
    %429 = vmatpush1.msra.mxu0 %v413
    %430 = vmatprep.subr.mxu0 0.0
    %431 = vmatpush1.msra.mxu0 %v414
    %432 = vmatprep.subr.mxu0 0.0
    %433 = vmatpush1.msra.mxu0 %v415
    %434 = vmatprep.subr.mxu0 0.0
    %435 = vmatpush1.msra.mxu0 %v416
    %436 = vmatprep.subr.mxu0 0.0
    %437 = vmatpush1.msra.mxu0 %v417
    %438 = vmatprep.subr.mxu0 0.0
    %439 = vmatpush1.msra.mxu0 0.0
    %440 = vmatprep.subr.mxu0 0.0
    %441 = vmatpush1.msra.mxu0 0.0
    %442 = vmatprep.subr.mxu0 0.0
    %443 = vmatpush1.msra.mxu0 0.0
    %444 = vmatprep.subr.mxu0 0.0
    %445 = vmatpush1.msra.mxu0 0.0
    %446 = vmatprep.subr.mxu0 0.0
    %447 = vmatpush1.msra.mxu0 0.0
    %448 = vmatprep.subr.mxu0 0.0
    %449 = vmatpush1.msra.mxu0 0.0
    %450 = vmatprep.subr.mxu0 0.0
    %451 = vmatpush1.msra.mxu0 0.0
    %452 = vmatprep.subr.mxu0 0.0
    %453 = vmatpush1.msra.mxu0 0.0
    %454 = vmatprep.subr.mxu0 0.0
    %455 = vmatpush1.msra.mxu0 0.0
    %456 = vmatprep.subr.mxu0 0.0
    %457 = vmatpush1.msra.mxu0 0.0
    %458 = vmatprep.subr.mxu0 0.0
    %459 = vmatpush1.msra.mxu0 0.0
    %460 = vmatprep.subr.mxu0 0.0
    %461 = vmatpush1.msra.mxu0 0.0
    %462 = vmatprep.subr.mxu0 0.0
    %463 = vmatpush1.msra.mxu0 0.0
    %464 = vmatprep.subr.mxu0 0.0
    %465 = vmatpush1.msra.mxu0 0.0
    %466 = vmatprep.subr.mxu0 0.0
    %467 = vmatpush1.msra.mxu0 0.0
    %468 = vmatprep.subr.mxu0 0.0
    %469 = vmatpush1.msra.mxu0 0.0
    %470 = vmatprep.subr.mxu0 0.0
    %471 = vmatpush1.msra.mxu0 0.0
    %472 = vmatprep.subr.mxu0 0.0
    %473 = vmatpush1.msra.mxu0 0.0
    %474 = vmatprep.subr.mxu0 0.0
    %475 = vmatpush1.msra.mxu0 0.0
    %476 = vmatprep.subr.mxu0 0.0
    %477 = vmatpush1.msra.mxu0 0.0
    %478 = vmatprep.subr.mxu0 0.0
    %479 = vmatpush1.msra.mxu0 0.0
    %480 = vmatprep.subr.mxu0 0.0
    %481 = vmatpush1.msra.mxu0 0.0
    %482 = vmatprep.subr.mxu0 0.0
    %483 = vmatpush1.msra.mxu0 0.0
    %484 = vmatprep.subr.mxu0 0.0
    %485 = vmatpush1.msra.mxu0 0.0
    %486 = vmatprep.subr.mxu0 0.0
    %487 = vmatpush1.msra.mxu0 0.0
    %488 = vmatprep.subr.mxu0 0.0
    %489 = vmatpush1.msra.mxu0 0.0
    %490 = vmatprep.mubr.f32.mxu0 0.0
    %491 = vmatmul.mubr.f32.gmra.mrb[0].mxu0 %v424
    %v492 = vpop.f32.mrb[0].mxu0
    %v493 = vadd.f32 %v422, %v492
    %v494 = vpop.f32.mrb[0].mxu0
    %495 = vdwg.mxu0
    %v496 = vadd.f32 %v493, %v81
    %vm497 = vcmask 386048
    %v498 = vsel %vm497, %v496, 0.0
    %499 = vadd.xlane.f32.xlu0 %v498
    %v500 = vpop.xlane.xlu0 %499
    %v501 = vrcp.pop 48.0
    %v502 = vmul.f32 %v500, %v501
    %v503 = vsub.f32 %v496, %v502
    %v504 = vmul.f32 %v503, %v503
    %v505 = vsel %vm497, %v504, 0.0
    %506 = vadd.xlane.f32.xlu0 %v505
    %v507 = vpop.xlane.xlu0 %506
    %v508 = vmul.f32 %v507, %v501
    %v509 = vadd.f32 %v508, 1e-05
    %v510 = vrsqrt.pop %v509
    %v511 = vmul.f32 %v503, %v510
    %v512 = vld [vmem:[#allocation8 + $0x1] sm:$0x1]
    %v513 = vlaneseq
    %v514 = vshrl.u32 %v513, 7
    %v515 = vsub.s32 0, %v514
    %v516 = vrot.slane %v512, %v515
    %v517 = vmul.f32 %v511, %v516
    %v518 = vld [vmem:[#allocation8 + $0x2] sm:$0x1]
    %v519 = vlaneseq
    %v520 = vshrl.u32 %v519, 7
    %v521 = vsub.s32 0, %v520
    %v522 = vrot.slane %v518, %v521
    %v523 = vadd.f32 %v517, %v522
    %v524 = vld [vmem:[%s5] sm:$0xff]
    %v525 = vld [vmem:[%s5 + $0x8] sm:$0xff]
    %v526 = vld [vmem:[%s5 + $0x10] sm:$0xff]
    %v527 = vld [vmem:[%s5 + $0x18] sm:$0xff]
    %v528 = vld [vmem:[%s5 + $0x20] sm:$0xff]
    %v529 = vld [vmem:[%s5 + $0x28] sm:$0xff]
    %v530 = vld [vmem:[%s5 + $0x30] sm:$0xff]
    %v531 = vld [vmem:[%s5 + $0x38] sm:$0xff]
    %v532 = vld [vmem:[%s5 + $0x40] sm:$0xff]
    %v533 = vld [vmem:[%s5 + $0x48] sm:$0xff]
    %v534 = vld [vmem:[#allocation5] sm:$0x3]
    %v536 = vsel %vm363, %v534, 0
    %538 = vmatprep.subr.mxu0 0.0
    %539 = vmatpush1.msra.mxu0 %v530
    %540 = vmatprep.subr.mxu0 0.0
    %541 = vmatpush1.msra.mxu0 %v531
    %542 = vmatprep.subr.mxu0 0.0
    %543 = vmatpush1.msra.mxu0 0.0
    %544 = vmatprep.subr.mxu0 0.0
    %545 = vmatpush1.msra.mxu0 0.0
    %546 = vmatprep.subr.mxu0 0.0
    %547 = vmatpush1.msra.mxu0 0.0
    %548 = vmatprep.subr.mxu0 0.0
    %549 = vmatpush1.msra.mxu0 0.0
    %550 = vmatprep.subr.mxu0 0.0
    %551 = vmatpush1.msra.mxu0 0.0
    %552 = vmatprep.subr.mxu0 0.0
    %553 = vmatpush1.msra.mxu0 0.0
    %554 = vmatprep.subr.mxu0 0.0
    %555 = vmatpush1.msra.mxu0 0.0
    %556 = vmatprep.subr.mxu0 0.0
    %557 = vmatpush1.msra.mxu0 0.0
    %558 = vmatprep.subr.mxu0 0.0
    %559 = vmatpush1.msra.mxu0 0.0
    %560 = vmatprep.subr.mxu0 0.0
    %561 = vmatpush1.msra.mxu0 0.0
    %562 = vmatprep.subr.mxu0 0.0
    %563 = vmatpush1.msra.mxu0 0.0
    %564 = vmatprep.subr.mxu0 0.0
    %565 = vmatpush1.msra.mxu0 0.0
    %566 = vmatprep.subr.mxu0 0.0
    %567 = vmatpush1.msra.mxu0 0.0
    %568 = vmatprep.subr.mxu0 0.0
    %569 = vmatpush1.msra.mxu0 0.0
    %570 = vmatprep.subr.mxu0 0.0
    %571 = vmatpush1.msra.mxu0 0.0
    %572 = vmatprep.subr.mxu0 0.0
    %573 = vmatpush1.msra.mxu0 0.0
    %574 = vmatprep.subr.mxu0 0.0
    %575 = vmatpush1.msra.mxu0 0.0
    %576 = vmatprep.subr.mxu0 0.0
    %577 = vmatpush1.msra.mxu0 0.0
    %578 = vmatprep.subr.mxu0 0.0
    %579 = vmatpush1.msra.mxu0 0.0
    %580 = vmatprep.subr.mxu0 0.0
    %581 = vmatpush1.msra.mxu0 0.0
    %582 = vmatprep.subr.mxu0 0.0
    %583 = vmatpush1.msra.mxu0 0.0
    %584 = vmatprep.subr.mxu0 0.0
    %585 = vmatpush1.msra.mxu0 0.0
    %586 = vmatprep.subr.mxu0 0.0
    %587 = vmatpush1.msra.mxu0 0.0
    %588 = vmatprep.subr.mxu0 0.0
    %589 = vmatpush1.msra.mxu0 0.0
    %590 = vmatprep.subr.mxu0 0.0
    %591 = vmatpush1.msra.mxu0 0.0
    %592 = vmatprep.subr.mxu0 0.0
    %593 = vmatpush1.msra.mxu0 0.0
    %594 = vmatprep.subr.mxu0 0.0
    %595 = vmatpush1.msra.mxu0 0.0
    %596 = vmatprep.subr.mxu0 0.0
    %597 = vmatpush1.msra.mxu0 0.0
    %598 = vmatprep.subr.mxu0 0.0
    %599 = vmatpush1.msra.mxu0 0.0
    %600 = vmatprep.subr.mxu0 0.0
    %601 = vmatpush1.msra.mxu0 0.0
    %602 = vmatprep.mubr.f32.mxu0 0.0
    %603 = vmatmul.mubr.f32.gmra.mrb[0].mxu0 %v536
    %v604 = vpop.f32.mrb[0].mxu0
    %v605 = vadd.f32 0.0, %v604
    %v606 = vpop.f32.mrb[0].mxu0
    %607 = vdwg.mxu0
    %v609 = vsel %vm96, %v523, 0
    %611 = vmatprep.subr.mxu0 0.0
    %612 = vmatpush1.msra.mxu0 %v524
    %613 = vmatprep.subr.mxu0 0.0
    %614 = vmatpush1.msra.mxu0 %v525
    %615 = vmatprep.subr.mxu0 0.0
    %616 = vmatpush1.msra.mxu0 %v526
    %617 = vmatprep.subr.mxu0 0.0
    %618 = vmatpush1.msra.mxu0 %v527
    %619 = vmatprep.subr.mxu0 0.0
    %620 = vmatpush1.msra.mxu0 %v528
    %621 = vmatprep.subr.mxu0 0.0
    %622 = vmatpush1.msra.mxu0 %v529
    %623 = vmatprep.subr.mxu0 0.0
    %624 = vmatpush1.msra.mxu0 0.0
    %625 = vmatprep.subr.mxu0 0.0
    %626 = vmatpush1.msra.mxu0 0.0
    %627 = vmatprep.subr.mxu0 0.0
    %628 = vmatpush1.msra.mxu0 0.0
    %629 = vmatprep.subr.mxu0 0.0
    %630 = vmatpush1.msra.mxu0 0.0
    %631 = vmatprep.subr.mxu0 0.0
    %632 = vmatpush1.msra.mxu0 0.0
    %633 = vmatprep.subr.mxu0 0.0
    %634 = vmatpush1.msra.mxu0 0.0
    %635 = vmatprep.subr.mxu0 0.0
    %636 = vmatpush1.msra.mxu0 0.0
    %637 = vmatprep.subr.mxu0 0.0
    %638 = vmatpush1.msra.mxu0 0.0
    %639 = vmatprep.subr.mxu0 0.0
    %640 = vmatpush1.msra.mxu0 0.0
    %641 = vmatprep.subr.mxu0 0.0
    %642 = vmatpush1.msra.mxu0 0.0
    %643 = vmatprep.subr.mxu0 0.0
    %644 = vmatpush1.msra.mxu0 0.0
    %645 = vmatprep.subr.mxu0 0.0
    %646 = vmatpush1.msra.mxu0 0.0
    %647 = vmatprep.subr.mxu0 0.0
    %648 = vmatpush1.msra.mxu0 0.0
    %649 = vmatprep.subr.mxu0 0.0
    %650 = vmatpush1.msra.mxu0 0.0
    %651 = vmatprep.subr.mxu0 0.0
    %652 = vmatpush1.msra.mxu0 0.0
    %653 = vmatprep.subr.mxu0 0.0
    %654 = vmatpush1.msra.mxu0 0.0
    %655 = vmatprep.subr.mxu0 0.0
    %656 = vmatpush1.msra.mxu0 0.0
    %657 = vmatprep.subr.mxu0 0.0
    %658 = vmatpush1.msra.mxu0 0.0
    %659 = vmatprep.subr.mxu0 0.0
    %660 = vmatpush1.msra.mxu0 0.0
    %661 = vmatprep.subr.mxu0 0.0
    %662 = vmatpush1.msra.mxu0 0.0
    %663 = vmatprep.subr.mxu0 0.0
    %664 = vmatpush1.msra.mxu0 0.0
    %665 = vmatprep.subr.mxu0 0.0
    %666 = vmatpush1.msra.mxu0 0.0
    %667 = vmatprep.subr.mxu0 0.0
    %668 = vmatpush1.msra.mxu0 0.0
    %669 = vmatprep.subr.mxu0 0.0
    %670 = vmatpush1.msra.mxu0 0.0
    %671 = vmatprep.subr.mxu0 0.0
    %672 = vmatpush1.msra.mxu0 0.0
    %673 = vmatprep.subr.mxu0 0.0
    %674 = vmatpush1.msra.mxu0 0.0
    %675 = vmatprep.mubr.f32.mxu0 0.0
    %676 = vmatmul.mubr.f32.gmra.mrb[0].mxu0 %v609
    %v677 = vpop.f32.mrb[0].mxu0
    %v678 = vadd.f32 %v605, %v677
    %v679 = vpop.f32.mrb[0].mxu0
    %680 = vdwg.mxu0
    %v681 = vld [vmem:[#allocation8 + $0x3] sm:$0x1]
    %v682 = vlaneseq
    %v683 = vshrl.u32 %v682, 7
    %v684 = vsub.s32 0, %v683
    %v685 = vrot.slane %v681, %v684
    %v686 = vadd.f32 %v678, %v685
    %v687 = vmax.f32 %v686, 0.0
    %v688 = vld [vmem:[#allocation8 + $0x4] sm:$0x1]
    %v689 = vlaneseq
    %v690 = vshrl.u32 %v689, 7
    %v691 = vsub.s32 0, %v690
    %v692 = vrot.slane %v688, %v691
    %v694 = vsel %vm363, %v687, 0
    %696 = vmatprep.subr.mxu0 0.0
    %697 = vmatpush1.msra.mxu0 %v532
    %698 = vmatprep.subr.mxu0 0.0
    %699 = vmatpush1.msra.mxu0 %v533
    %700 = vmatprep.subr.mxu0 0.0
    %701 = vmatpush1.msra.mxu0 0.0
    %702 = vmatprep.subr.mxu0 0.0
    %703 = vmatpush1.msra.mxu0 0.0
    %704 = vmatprep.subr.mxu0 0.0
    %705 = vmatpush1.msra.mxu0 0.0
    %706 = vmatprep.subr.mxu0 0.0
    %707 = vmatpush1.msra.mxu0 0.0
    %708 = vmatprep.subr.mxu0 0.0
    %709 = vmatpush1.msra.mxu0 0.0
    %710 = vmatprep.subr.mxu0 0.0
    %711 = vmatpush1.msra.mxu0 0.0
    %712 = vmatprep.subr.mxu0 0.0
    %713 = vmatpush1.msra.mxu0 0.0
    %714 = vmatprep.subr.mxu0 0.0
    %715 = vmatpush1.msra.mxu0 0.0
    %716 = vmatprep.subr.mxu0 0.0
    %717 = vmatpush1.msra.mxu0 0.0
    %718 = vmatprep.subr.mxu0 0.0
    %719 = vmatpush1.msra.mxu0 0.0
    %720 = vmatprep.subr.mxu0 0.0
    %721 = vmatpush1.msra.mxu0 0.0
    %722 = vmatprep.subr.mxu0 0.0
    %723 = vmatpush1.msra.mxu0 0.0
    %724 = vmatprep.subr.mxu0 0.0
    %725 = vmatpush1.msra.mxu0 0.0
    %726 = vmatprep.subr.mxu0 0.0
    %727 = vmatpush1.msra.mxu0 0.0
    %728 = vmatprep.subr.mxu0 0.0
    %729 = vmatpush1.msra.mxu0 0.0
    %730 = vmatprep.subr.mxu0 0.0
    %731 = vmatpush1.msra.mxu0 0.0
    %732 = vmatprep.subr.mxu0 0.0
    %733 = vmatpush1.msra.mxu0 0.0
    %734 = vmatprep.subr.mxu0 0.0
    %735 = vmatpush1.msra.mxu0 0.0
    %736 = vmatprep.subr.mxu0 0.0
    %737 = vmatpush1.msra.mxu0 0.0
    %738 = vmatprep.subr.mxu0 0.0
    %739 = vmatpush1.msra.mxu0 0.0
    %740 = vmatprep.subr.mxu0 0.0
    %741 = vmatpush1.msra.mxu0 0.0
    %742 = vmatprep.subr.mxu0 0.0
    %743 = vmatpush1.msra.mxu0 0.0
    %744 = vmatprep.subr.mxu0 0.0
    %745 = vmatpush1.msra.mxu0 0.0
    %746 = vmatprep.subr.mxu0 0.0
    %747 = vmatpush1.msra.mxu0 0.0
    %748 = vmatprep.subr.mxu0 0.0
    %749 = vmatpush1.msra.mxu0 0.0
    %750 = vmatprep.subr.mxu0 0.0
    %751 = vmatpush1.msra.mxu0 0.0
    %752 = vmatprep.subr.mxu0 0.0
    %753 = vmatpush1.msra.mxu0 0.0
    %754 = vmatprep.subr.mxu0 0.0
    %755 = vmatpush1.msra.mxu0 0.0
    %756 = vmatprep.subr.mxu0 0.0
    %757 = vmatpush1.msra.mxu0 0.0
    %758 = vmatprep.subr.mxu0 0.0
    %759 = vmatpush1.msra.mxu0 0.0
    %760 = vmatprep.mubr.f32.mxu0 0.0
    %761 = vmatmul.mubr.f32.gmra.mrb[0].mxu0 %v694
    %v762 = vpop.f32.mrb[0].mxu0
    %v763 = vadd.f32 %v692, %v762
    %v764 = vpop.f32.mrb[0].mxu0
    %765 = vdwg.mxu0
    %vm766 = vcmask 123904
    %767 = vst.msk [vmem:[#allocation10] sm:$0x3] %vm766, %v763
    // Predicated region
    $region46: #{tpu_custom_call.1} parent=1 // pred_check
      _
    $region47: #{tpu_custom_call.1} parent=1 // pred_check_branch
      %769 = sbr.rel (0) target = $region49
    $region48: #{tpu_custom_call.1} parent=1 // pred_region
      %s771 = ssub.s32 32, 32
      %772 = vsyncadd [#allocation4], %s771
      %s774 = sshll.u32 [#allocation10], 4
      %s775 = int_to_ptr.vmem [resolvable:$true] %s774
      %777 = dma.vmem_to_hbm [thread:$0]  %s775, 32, %s7, [#allocation4]
    $region49: #{tpu_custom_call.1} parent=1 // pred_fallthru
      _
    // Predicated region
    $region50: #{tpu_custom_call.1} parent=1 // pred_check
      _
    $region51: #{tpu_custom_call.1} parent=1 // pred_check_branch
      %779 = sbr.rel (0) target = $region53
    $region52: #{tpu_custom_call.1} parent=1 // pred_region
      %s781 = ssub.s32 64, 64
      %782 = vsyncadd [#allocation12], %s781
      %s784 = sshll.u32 [#allocation11], 4
      %s785 = int_to_ptr.vmem [resolvable:$true] %s784
      %787 = dma.vmem_to_hbm [thread:$0]  %s785, 64, %s8, [#allocation12]
    $region53: #{tpu_custom_call.1} parent=1 // pred_fallthru
      _
    // Predicated region
    $region54: #{tpu_custom_call.1} parent=1 // pred_check
      _
    $region55: #{tpu_custom_call.1} parent=1 // pred_check_branch
      %789 = sbr.rel (0) target = $region57
    $region56: #{tpu_custom_call.1} parent=1 // pred_region
      %790 = dma.done [#allocation4], 32
    $region57: #{tpu_custom_call.1} parent=1 // pred_fallthru
      _
    // Predicated region
    $region58: #{tpu_custom_call.1} parent=1 // pred_check
      _
    $region59: #{tpu_custom_call.1} parent=1 // pred_check_branch
      %792 = sbr.rel (0) target = $region61
    $region60: #{tpu_custom_call.1} parent=1 // pred_region
      %793 = dma.done [#allocation12], 64
    $region61: #{tpu_custom_call.1} parent=1 // pred_fallthru
      _
    %794 = vsyncpa [#allocation3], 1
    %795 = vsyncpa [#allocation6], 1
    %796 = vsyncpa [#allocation9], 1
    %797 = vsyncpa [#allocation4], 1
    %798 = vsyncpa [#allocation12], 1

</llo_original>
